<compile_context>
chip_gen: v7x
topology: tpu7x:2x2x1
jax: 0.10.0
libtpu: 0.0.40
codegen_flags: <defaults>
</compile_context>

<pallas_src>
import functools

import jax
import jax.numpy as jnp
from jax.experimental import pallas as pl
from jax.experimental.pallas import tpu as pltpu

# Force full f32 matmul precision so the Pallas path and the pure-JAX reference
# share numerics (TPU default would otherwise use bf16 MXU passes).
jax.config.update("jax_default_matmul_precision", "highest")

EPS = 1e-12                              # F.normalize default
VMEM_LIMIT = 32 * 1024 * 1024            # explicit scoped-VMEM budget (safe on v5e/v6e/v7x)
ROW_TILE_BUDGET = 16 * 1024 * 1024       # double-buffered in+out bytes per grid step


# ----------------------------------------------------------------------------- helpers
def _round_up(a, m):
    return (a + m - 1) // m * m


def _pick_row_tile(rows, bytes_per_row):
    """Largest row tile fitting the VMEM budget (multiple of 8, <=1024, >=2 grid steps)."""
    if rows <= 8:
        return rows                                        # single full-array block (always legal)
    tile = (ROW_TILE_BUDGET // max(bytes_per_row, 1)) // 8 * 8
    tile = max(8, min(1024, tile))
    tile = min(tile, _round_up(rows, 8))
    if -(-rows // tile) < 2:                               # keep >=2 steps so v7x megacore can split
        tile = max(8, _round_up(-(-rows // 2), 8))
    return tile


def _gelu_tanh(x):
    # tanh-approximate GELU (same formula in kernel and reference).
    return 0.5 * x * (1.0 + jnp.tanh(0.7978845608028654 * (x + 0.044715 * x * x * x)))


# ----------------------------------------------------------------------------- RMSNorm kernel
def _rmsnorm_kernel(x_ref, g_ref, o_ref):
    # x_ref: (row_tile, dim); g_ref: (1, dim) gamma pre-scaled by sqrt(dim)
    x = x_ref[...].astype(jnp.float32)
    g = g_ref[...].astype(jnp.float32)
    ss = jnp.sum(x * x, axis=-1, keepdims=True)                              # (rows, 1)
    inv = pl.reciprocal(jnp.maximum(jnp.sqrt(ss), EPS), approx=False)        # per-row reciprocal
    o_ref[...] = (x * inv * g).astype(o_ref.dtype)


def rmsnorm(x, gamma):
    """F.normalize(x, dim=-1) * sqrt(dim) * gamma  (Pallas kernel)."""
    orig_shape = x.shape
    dim = orig_shape[-1]
    x2d = x.reshape(-1, dim)
    rows = x2d.shape[0]
    itemsize = jnp.dtype(x.dtype).itemsize
    # Fold sqrt(dim) into gamma once at trace time (not per-tile inside the kernel).
    g2d = (gamma.astype(jnp.float32) * (float(dim) ** 0.5)).reshape(1, dim)

    # Double-buffered input + output per grid step.
    row_tile = _pick_row_tile(rows, 2 * 2 * dim * max(itemsize, 4))
    # TODO(synk): for very large dim (>= 8k f32) split dim onto a second grid axis with a
    # two-pass accumulator instead of shrinking row_tile.
    grid = (pl.cdiv(rows, row_tile),)

    out = pl.pallas_call(
        _rmsnorm_kernel,
        out_shape=jax.ShapeDtypeStruct((rows, dim), x.dtype),
        grid_spec=pltpu.PrefetchScalarGridSpec(
            num_scalar_prefetch=0,
            grid=grid,
            in_specs=[
                pl.BlockSpec((row_tile, dim), lambda i: (i, 0)),
                pl.BlockSpec((1, dim), lambda i: (0, 0)),      # gamma stays resident
            ],
            out_specs=pl.BlockSpec((row_tile, dim), lambda i: (i, 0)),
        ),
        compiler_params=pltpu.CompilerParams(
            dimension_semantics=("parallel",),
            vmem_limit_bytes=VMEM_LIMIT,
        ),
    )(x2d, g2d)
    return out.reshape(orig_shape)


# ----------------------------------------------------------------------------- GEGLU kernel
def _geglu_kernel(h_ref, o_ref):
    h = h_ref[...].astype(jnp.float32)                    # (row_tile, 2*d_inner)
    d = h.shape[-1] // 2
    x, gate = h[:, :d], h[:, d:]
    o_ref[...] = (_gelu_tanh(gate) * x).astype(o_ref.dtype)


def geglu(h):
    """GEGLU: x, gate = split(h, 2); gelu(gate) * x  (Pallas kernel)."""
    orig_shape = h.shape
    two_d = orig_shape[-1]
    d = two_d // 2
    h2d = h.reshape(-1, two_d)
    rows = h2d.shape[0]
    itemsize = jnp.dtype(h.dtype).itemsize

    row_tile = _pick_row_tile(rows, 2 * (two_d + d) * max(itemsize, 4))
    grid = (pl.cdiv(rows, row_tile),)

    out = pl.pallas_call(
        _geglu_kernel,
        out_shape=jax.ShapeDtypeStruct((rows, d), h.dtype),
        grid_spec=pltpu.PrefetchScalarGridSpec(
            num_scalar_prefetch=0,
            grid=grid,
            in_specs=[pl.BlockSpec((row_tile, two_d), lambda i: (i, 0))],
            out_specs=pl.BlockSpec((row_tile, d), lambda i: (i, 0)),
        ),
        compiler_params=pltpu.CompilerParams(
            dimension_semantics=("parallel",),
            vmem_limit_bytes=VMEM_LIMIT,
        ),
    )(h2d)
    return out.reshape(*orig_shape[:-1], d)


# ----------------------------------------------------------------------------- attention kernel
def _attn_kernel(q_ref, k_ref, v_ref, o_ref, *, scale, causal):
    # Per (batch, head): q (N, Dh); k, v (M, Dh).
    q = q_ref[...].astype(jnp.float32)
    k = k_ref[...].astype(jnp.float32)
    v = v_ref[...].astype(jnp.float32)
    s = jax.lax.dot_general(q, k, (((1,), (1,)), ((), ())),
                            preferred_element_type=jnp.float32) * scale      # (N, M)
    n, m = s.shape
    if causal:
        row = jax.lax.broadcasted_iota(jnp.int32, (n, m), 0)
        col = jax.lax.broadcasted_iota(jnp.int32, (n, m), 1)
        s = jnp.where(col <= row + (m - n), s, -1e30)
    s_max = jnp.max(s, axis=-1, keepdims=True)
    p = jnp.exp(s - s_max)
    denom = jnp.sum(p, axis=-1, keepdims=True)
    o = jnp.dot(p, v, preferred_element_type=jnp.float32)
    o_ref[...] = (o * pl.reciprocal(denom, approx=False)).astype(o_ref.dtype)


def attention(q, k, v, *, scale, causal):
    """softmax(q k^T * scale [+ causal mask]) v, one (batch, head) block per grid step."""
    B, H, N, Dh = q.shape
    M = k.shape[2]
    kernel = functools.partial(_attn_kernel, scale=scale, causal=causal)
    # TODO(synk): for long sequences this should become a flash-attention style kernel
    # (kv grid axis + online softmax) instead of full-sequence blocks.
    return pl.pallas_call(
        kernel,
        out_shape=jax.ShapeDtypeStruct((B, H, N, Dh), q.dtype),
        grid_spec=pltpu.PrefetchScalarGridSpec(
            num_scalar_prefetch=0,
            grid=(B, H),
            in_specs=[
                pl.BlockSpec((None, None, N, Dh), lambda b, h: (b, h, 0, 0)),
                pl.BlockSpec((None, None, M, Dh), lambda b, h: (b, h, 0, 0)),
                pl.BlockSpec((None, None, M, Dh), lambda b, h: (b, h, 0, 0)),
            ],
            out_specs=pl.BlockSpec((None, None, N, Dh), lambda b, h: (b, h, 0, 0)),
        ),
        compiler_params=pltpu.CompilerParams(
            dimension_semantics=("parallel", "parallel"),
            vmem_limit_bytes=VMEM_LIMIT,
        ),
    )(q, k, v)


# ----------------------------------------------------------------------------- pure-JAX references
def rmsnorm_ref(x, gamma):
    dim = x.shape[-1]
    norm = jnp.sqrt(jnp.sum(jnp.square(x.astype(jnp.float32)), axis=-1, keepdims=True))
    return (x / jnp.maximum(norm, EPS) * (float(dim) ** 0.5) * gamma).astype(x.dtype)


def geglu_ref(h):
    d = h.shape[-1] // 2
    x, gate = h[..., :d], h[..., d:]
    return _gelu_tanh(gate) * x


def attention_ref(q, k, v, *, scale, causal):
    s = jnp.einsum("bhnd,bhmd->bhnm", q.astype(jnp.float32), k.astype(jnp.float32)) * scale
    n, m = s.shape[-2], s.shape[-1]
    if causal:
        row = jnp.arange(n)[:, None]
        col = jnp.arange(m)[None, :]
        s = jnp.where(col <= row + (m - n), s, -1e30)
    p = jax.nn.softmax(s, axis=-1)
    return jnp.einsum("bhnm,bhmd->bhnd", p, v.astype(jnp.float32)).astype(q.dtype)


# ----------------------------------------------------------------------------- rotary embedding
def rope_cos_sin(seq_len, dim_head, theta=10000.0):
    inv = 1.0 / (theta ** (jnp.arange(0, dim_head, 2, dtype=jnp.float32) / dim_head))
    freqs = jnp.arange(seq_len, dtype=jnp.float32)[:, None] * inv[None, :]
    freqs = jnp.repeat(freqs, 2, axis=-1)          # interleaved (f0,f0,f1,f1,...)
    return jnp.cos(freqs), jnp.sin(freqs)


def apply_rope(x, cos, sin):
    # lucidrains rotary_embedding_torch style: rotate interleaved pairs.
    xp = x.reshape(*x.shape[:-1], -1, 2)
    x_rot = jnp.stack((-xp[..., 1], xp[..., 0]), axis=-1).reshape(x.shape)
    return x * cos + x_rot * sin


# ----------------------------------------------------------------------------- model
def init_params(key, *, dim, depth, heads, kv_heads, dim_head, ff_mult):
    dim_inner = int(dim * ff_mult * 2 / 3)

    def dense(k, fan_in, fan_out):
        return jax.random.normal(k, (fan_in, fan_out), jnp.float32) * (fan_in ** -0.5)

    layers = []
    for _ in range(depth):
        key, kq, kkv, ko, k1, k2 = jax.random.split(key, 6)
        layers.append({
            "attn": {
                "gamma": jnp.ones((dim,), jnp.float32),
                "wq": dense(kq, dim, heads * dim_head),
                "wkv": dense(kkv, dim, 2 * kv_heads * dim_head),
                "wo": dense(ko, heads * dim_head, dim),
            },
            "ff": {
                "gamma": jnp.ones((dim,), jnp.float32),
                "w1": dense(k1, dim, 2 * dim_inner),
                "b1": jnp.zeros((2 * dim_inner,), jnp.float32),
                "w2": dense(k2, dim_inner, dim),
                "b2": jnp.zeros((dim,), jnp.float32),
            },
        })
    return {"layers": layers, "final_gamma": jnp.ones((dim,), jnp.float32)}


def transformer_forward(params, x, *, heads, kv_heads, dim_head, causal=True, use_pallas=True):
    rms = rmsnorm if use_pallas else rmsnorm_ref
    attend = attention if use_pallas else attention_ref
    geglu_fn = geglu if use_pallas else geglu_ref

    b, n, _ = x.shape
    scale = float(dim_head) ** -0.5
    cos, sin = rope_cos_sin(n, dim_head)

    for layer in params["layers"]:
        # ---- self-attention (pre-norm, rotary, causal) + residual
        a = layer["attn"]
        h = rms(x, a["gamma"])
        q = (h @ a["wq"]).reshape(b, n, heads, dim_head).transpose(0, 2, 1, 3)
        kv = h @ a["wkv"]
        k = kv[..., : kv_heads * dim_head].reshape(b, n, kv_heads, dim_head).transpose(0, 2, 1, 3)
        v = kv[..., kv_heads * dim_head:].reshape(b, n, kv_heads, dim_head).transpose(0, 2, 1, 3)
        q = apply_rope(q, cos, sin)
        k = apply_rope(k, cos, sin)
        if kv_heads != heads:                       # grouped-query: expand kv heads
            rep = heads // kv_heads
            k = jnp.repeat(k, rep, axis=1)
            v = jnp.repeat(v, rep, axis=1)
        o = attend(q, k, v, scale=scale, causal=causal)
        o = o.transpose(0, 2, 1, 3).reshape(b, n, heads * dim_head)
        # TODO(synk): dense projections use XLA matmul (small, non-128-aligned widths);
        # dropout (p=0), KV-cache and cross-attention (add_null_kv) branches are omitted.
        x = o @ a["wo"] + x

        # ---- feed-forward (pre-norm, GEGLU) + residual
        f = layer["ff"]
        h = rms(x, f["gamma"])
        u = h @ f["w1"] + f["b1"]
        x = geglu_fn(u) @ f["w2"] + f["b2"] + x

    return rms(x, params["final_gamma"])


# ----------------------------------------------------------------------------- test
if __name__ == "__main__":
    # Small shapes consistent with the module: dim_head=64 (module default),
    # dim a multiple of 128 so the Pallas blocks are lane-dense.
    batch, seq = 2, 8
    dim, depth, heads, kv_heads, dim_head, ff_mult = 128, 2, 2, 2, 64, 3

    key = jax.random.PRNGKey(0)
    k_params, k_x = jax.random.split(key)
    params = init_params(k_params, dim=dim, depth=depth, heads=heads,
                         kv_heads=kv_heads, dim_head=dim_head, ff_mult=ff_mult)
    x = jax.random.normal(k_x, (batch, seq, dim), dtype=jnp.float32)

    fwd = functools.partial(transformer_forward, heads=heads, kv_heads=kv_heads,
                            dim_head=dim_head, causal=True)

    out = jax.block_until_ready(fwd(params, x, use_pallas=True))
    ref = jax.block_until_ready(fwd(params, x, use_pallas=False))

    assert out.shape == x.shape
    max_err = float(jnp.max(jnp.abs(out - ref)))
    assert jnp.allclose(out, ref, atol=1e-4, rtol=1e-4), \
        f"mismatch vs reference (max |err| = {max_err})"
    print("KERNEL_OK")
</pallas_src>

<mosaic_0001>
module attributes {stable_mosaic.version = 11 : i64} {
  func.func @_rmsnorm_kernel(%arg0: i32, %arg1: memref<8x128xf32, #tpu.memory_space<vmem>>, %arg2: memref<1x128xf32, #tpu.memory_space<vmem>>, %arg3: memref<8x128xf32, #tpu.memory_space<vmem>>) attributes {dimension_semantics = [#tpu.dimension_semantics<parallel>], iteration_bounds = array<i64: 2>, scalar_prefetch = 0 : i64, scratch_operands = 0 : i64, tpu.core_type = #tpu.core_type<tc>, window_params = [{transform_indices = @transform_0, window_bounds = array<i64: 8, 128>}, {pipeline_mode = #tpu.pipeline_mode<synchronous>, transform_indices = @transform_1, window_bounds = array<i64: 1, 128>}, {transform_indices = @transform_2, window_bounds = array<i64: 8, 128>}]} {
    %c0 = arith.constant 0 : index
    %c0_0 = arith.constant 0 : index
    %0 = vector.load %arg1[%c0, %c0_0] : memref<8x128xf32, #tpu.memory_space<vmem>>, vector<8x128xf32>
    %c0_1 = arith.constant 0 : index
    %c0_2 = arith.constant 0 : index
    %1 = vector.load %arg2[%c0_1, %c0_2] : memref<1x128xf32, #tpu.memory_space<vmem>>, vector<1x128xf32>
    %2 = arith.mulf %0, %0 : vector<8x128xf32>
    %cst = arith.constant dense<0.000000e+00> : vector<8xf32>
    %3 = vector.multi_reduction <add>, %2, %cst [1] : vector<8x128xf32> to vector<8xf32>
    %4 = vector.shape_cast %3 : vector<8xf32> to vector<8x1xf32>
    %5 = math.sqrt %4 : vector<8x1xf32>
    %cst_3 = arith.constant 9.99999996E-13 : f32
    %6 = vector.broadcast %cst_3 : f32 to vector<8x1xf32>
    %7 = arith.maximumf %5, %6 : vector<8x1xf32>
    %8 = tpu.reciprocal %7 : vector<8x1xf32> -> vector<8x1xf32>
    %9 = vector.broadcast %8 : vector<8x1xf32> to vector<8x128xf32>
    %10 = arith.mulf %0, %9 : vector<8x128xf32>
    %11 = vector.broadcast %1 : vector<1x128xf32> to vector<8x128xf32>
    %12 = arith.mulf %10, %11 : vector<8x128xf32>
    %c0_4 = arith.constant 0 : index
    %c0_5 = arith.constant 0 : index
    %13 = vector.load %arg3[%c0_4, %c0_5] : memref<8x128xf32, #tpu.memory_space<vmem>>, vector<8x128xf32>
    tpu.vector_store %arg3[%c0_4, %c0_5], %12 {strides = array<i32>} : memref<8x128xf32, #tpu.memory_space<vmem>>, vector<8x128xf32>,
    return
  }
  func.func @transform_0(%arg0: i32) -> (i32, i32) {
    %c0_i32 = arith.constant 0 : i32
    %c0_i32_0 = arith.constant 0 : i32
    return %arg0, %c0_i32 : i32, i32
  }
  func.func @transform_1(%arg0: i32) -> (i32, i32) {
    %c0_i32 = arith.constant 0 : i32
    %c0_i32_0 = arith.constant 0 : i32
    %c0_i32_1 = arith.constant 0 : i32
    return %c0_i32, %c0_i32_0 : i32, i32
  }
  func.func @transform_2(%arg0: i32) -> (i32, i32) {
    %c0_i32 = arith.constant 0 : i32
    %c0_i32_0 = arith.constant 0 : i32
    return %arg0, %c0_i32 : i32, i32
  }
}

</mosaic_0001>

<llo_original>
// kernel: tpu_custom_call.1
$region0: #{tpu_custom_call.1}
  #allocation0 [shape = 'u32[]', space=smem, size = 0x4, offset = 0x4, fixed_abs, tag = 'smem constant byte address 0x4 - core index']
  #allocation1 [shape = 'u32[144,128]{1,0:T(1,128)}', space=vmem, size = 0x12000, scoped, tag = 'internal scratch']
  %s0 = inlined_call_operand.hbm [shape: f32[16,128], index: 0, kind: input, shape index: {}]
  %s1 = inlined_call_operand.vmem [shape: f32[1,128], index: 1, kind: input, shape index: {}]
  %s2 = inlined_call_operand.hbm [shape: f32[16,128], index: 2, kind: output, shape index: {}]
  %s3 = sld [smem:[#allocation0]]
  $region45: #{tpu_custom_call.1} parent=0
    _
  %s5 = ssub.s32 1, %s3
  %s6 = scalar_select 0, %s5, %s3
  $region1: #{tpu_custom_call.1} parent=0
    #allocation2 [shape = 'u8[8192]{0}', space=vmem, size = 0x2000, scoped, tag = 'input window, operand 0']
    #allocation3 [shape = 's32[2]{0}', space=sflag, size = 0x8, scoped, tag = 'scoped memory for tpu_custom_call.1']
    #allocation4 [shape = 's32[2]{0}', space=sflag, size = 0x8, scoped, tag = 'scoped memory for tpu_custom_call.1']
    #allocation5 [shape = 'u8[8192]{0}', space=vmem, size = 0x2000, scoped, tag = 'output window, operand 0']
    %7 = vsyncpa [#allocation3], 0
    %s8 = scalar_lea.sflag [#allocation3], 1
    %9 = vsyncpa %s8, 0
    %10 = vsyncpa [#allocation4], 0
    %s11 = scalar_lea.sflag [#allocation4], 1
    %12 = vsyncpa %s11, 0
    loop: start=0, step=1, limit=4
    $region2: #{tpu_custom_call.1} parent=1 // loop_pre_header
      _
    $region3: #{tpu_custom_call.1} parent=1 // loop_header
      %s14 = sphi 0, %s18
      %p15 = scmp.ge.s32.totalorder %s14, 4
      %s24 = sphi 0, %s26
      %s27 = sphi 0, %s24
      %s28 = sphi 0, %s27
      %s44 = sphi 0, %s28
      %s48 = sphi 0, %s48
      %s50 = sphi 0, %s48
      %s51 = sphi 0, %s50
      %s65 = sphi 0, %s51
      %s71 = sphi 0, %s73
      %s74 = sphi 0, %s71
      %s75 = sphi 0, %s74
      %s91 = sphi 0, %s75
    $region4: #{tpu_custom_call.1} parent=1 // loop_header_branch
      %17 = sbr.rel (%p15) target = $region8
    $region5: #{tpu_custom_call.1} parent=1 // loop_body
      %s19 = ssub.s32 %s14, 1
      %s20 = ssub.s32 %s14, 2
      %s21 = sadd.s32 %s14, 1
      %s22 = ssub.s32 %s14, %s21
      %p23 = scmp.eq.s32.totalorder %s22, 0
      %s25 = sadd.s32 %s24, 1
      %s26 = scalar_select %p23, %s24, %s25
      %p29 = pneg %p23
      %p30 = scmp.eq.s32.totalorder %s14, 1
      %p31 = por %p29, %p30
      %p32 = scmp.ne.s32.totalorder %s24, %s27
      %p33 = scmp.eq.s32.totalorder %s14, 0
      %p34 = por %p32, %p33
      %p35 = scmp.ne.s32.totalorder %s24, %s27
      %p36 = scmp.eq.s32.totalorder %s19, 1
      %p37 = por %p35, %p36
      %p38 = scmp.ne.s32.totalorder %s27, %s28
      %p39 = scmp.eq.s32.totalorder %s19, 0
      %p40 = por %p38, %p39
      %p41 = scmp.ne.s32.totalorder %s27, %s28
      %p42 = scmp.eq.s32.totalorder %s20, 1
      %p43 = por %p41, %p42
      %p45 = scmp.ne.s32.totalorder %s28, %s44
      %p46 = scmp.eq.s32.totalorder %s20, 0
      %p47 = por %p45, %p46
      %s49 = sadd.s32 %s48, 1
      %p52 = scmp.eq.s32.totalorder %s14, 1
      %p53 = scmp.ne.s32.totalorder %s48, %s50
      %p54 = scmp.eq.s32.totalorder %s14, 0
      %p55 = por %p53, %p54
      %p56 = scmp.ne.s32.totalorder %s48, %s50
      %p57 = scmp.eq.s32.totalorder %s19, 1
      %p58 = por %p56, %p57
      %p59 = scmp.ne.s32.totalorder %s50, %s51
      %p60 = scmp.eq.s32.totalorder %s19, 0
      %p61 = por %p59, %p60
      %p62 = scmp.ne.s32.totalorder %s50, %s51
      %p63 = scmp.eq.s32.totalorder %s20, 1
      %p64 = por %p62, %p63
      %p66 = scmp.ne.s32.totalorder %s51, %s65
      %p67 = scmp.eq.s32.totalorder %s20, 0
      %p68 = por %p66, %p67
      %s69 = ssub.s32 %s14, %s21
      %p70 = scmp.eq.s32.totalorder %s69, 0
      %s72 = sadd.s32 %s71, 1
      %s73 = scalar_select %p70, %s71, %s72
      %p76 = pneg %p70
      %p77 = scmp.eq.s32.totalorder %s14, 1
      %p78 = por %p76, %p77
      %p79 = scmp.ne.s32.totalorder %s71, %s74
      %p80 = scmp.eq.s32.totalorder %s14, 0
      %p81 = por %p79, %p80
      %p82 = scmp.ne.s32.totalorder %s71, %s74
      %p83 = scmp.eq.s32.totalorder %s19, 1
      %p84 = por %p82, %p83
      %p85 = scmp.ne.s32.totalorder %s74, %s75
      %p86 = scmp.eq.s32.totalorder %s19, 0
      %p87 = por %p85, %p86
      %p88 = scmp.ne.s32.totalorder %s74, %s75
      %p89 = scmp.eq.s32.totalorder %s20, 1
      %p90 = por %p88, %p89
      %p92 = scmp.ne.s32.totalorder %s75, %s91
      %p93 = scmp.eq.s32.totalorder %s20, 0
      %p94 = por %p92, %p93
      %p95 = scmp.le.s32.totalorder 1, %s14
      %p96 = scmp.lt.s32.totalorder %s14, 3
      %p97 = pnand %p95, %p96
      %p98 = pneg %p97
      // Predicated region
      $region9: #{tpu_custom_call.1} parent=5 // pred_check
        _
      $region10: #{tpu_custom_call.1} parent=5 // pred_check_branch
        %100 = sbr.rel (%p97) target = $region12
      $region11: #{tpu_custom_call.1} parent=5 // pred_region
        %s101 = ssub.s32 %s14, 1
        // Predicated region
        $region13: #{tpu_custom_call.1} parent=11 // pred_check
          %p102 = pneg %p61
        $region14: #{tpu_custom_call.1} parent=11 // pred_check_branch
          %104 = sbr.rel (%p102) target = $region16
        $region15: #{tpu_custom_call.1} parent=11 // pred_region
          _
        $region16: #{tpu_custom_call.1} parent=11 // pred_fallthru
          _
      $region12: #{tpu_custom_call.1} parent=5 // pred_fallthru
        _
      %p105 = scmp.lt.s32.totalorder %s14, 2
      // Predicated region
      $region17: #{tpu_custom_call.1} parent=5 // pred_check
        %p106 = pneg %p105
      $region18: #{tpu_custom_call.1} parent=5 // pred_check_branch
        %108 = sbr.rel (%p106) target = $region20
      $region19: #{tpu_custom_call.1} parent=5 // pred_region
        // Predicated region
        $region21: #{tpu_custom_call.1} parent=19 // pred_check
          %p109 = pneg %p34
        $region22: #{tpu_custom_call.1} parent=19 // pred_check_branch
          %111 = sbr.rel (%p109) target = $region24
        $region23: #{tpu_custom_call.1} parent=19 // pred_region
          %s112 = sand.u32 %s24, 1
          %s113 = scalar_lea.sflag [#allocation3], %s112
          %s114 = sand.u32 %s24, 1
          %s115 = smul.addr %s114, 8
          %s116 = scalar_lea.vmem [#allocation2], %s115
          %s118 = ssub.s32 128, 128
          %119 = vsyncadd %s113, %s118
          %s120 = smul.addr %s14, 128
          %s121 = scalar_lea.hbm %s0, %s120
          %s123 = sshll.u32 %s116, 4
          %s124 = int_to_ptr.vmem [resolvable:$true] %s123
          %126 = dma.hbm_to_vmem [thread:$0]  %s121, 128, %s124, %s113
        $region24: #{tpu_custom_call.1} parent=19 // pred_fallthru
          _
      $region20: #{tpu_custom_call.1} parent=5 // pred_fallthru
        _
      %p127 = scmp.le.s32.totalorder 1, %s14
      %p128 = scmp.lt.s32.totalorder %s14, 3
      %p129 = pnand %p127, %p128
      %p130 = pneg %p129
      // Predicated region
      $region25: #{tpu_custom_call.1} parent=5 // pred_check
        _
      $region26: #{tpu_custom_call.1} parent=5 // pred_check_branch
        %132 = sbr.rel (%p129) target = $region28
      $region27: #{tpu_custom_call.1} parent=5 // pred_region
        %s133 = ssub.s32 %s14, 1
        %s134 = sand.u32 %s27, 1
        %s135 = scalar_lea.sflag [#allocation3], %s134
        %s136 = sand.u32 %s27, 1
        %s137 = smul.addr %s136, 8
        %s138 = scalar_lea.vmem [#allocation2], %s137
        // Predicated region
        $region29: #{tpu_custom_call.1} parent=27 // pred_check
          %p139 = pneg %p40
        $region30: #{tpu_custom_call.1} parent=27 // pred_check_branch
          %141 = sbr.rel (%p139) target = $region32
        $region31: #{tpu_custom_call.1} parent=27 // pred_region
          %142 = dma.done %s135, 128
        $region32: #{tpu_custom_call.1} parent=27 // pred_fallthru
          _
        %s143 = sand.u32 %s27, 1
        %s144 = scalar_lea.sflag [#allocation3], %s143
        %s145 = sand.u32 %s27, 1
        %s146 = smul.addr %s145, 8
        %s147 = scalar_lea.vmem [#allocation2], %s146
        %p148 = pneg %p40
        %p149 = pneg %p37
        %p150 = pneg %p61
        %p151 = pneg %p58
        %p152 = pneg %p87
        %p153 = pneg %p84
        %s154 = sand.u32 %s74, 1
        %s155 = scalar_lea.sflag [#allocation4], %s154
        %s156 = sand.u32 %s74, 1
        %s157 = smul.addr %s156, 8
        %s158 = scalar_lea.vmem [#allocation5], %s157
        %v159 = vld [vmem:[%s138] sm:$0xff]
        %v160 = vld [vmem:[%s1] sm:$0x1]
        %v161 = vmul.f32 %v159, %v159
        %162 = vadd.xlane.f32.xlu0 %v161
        %v163 = vpop.xlane.xlu0 %162
        %v164 = vrsqrt.pop %v163
        %v165 = vmul.f32 %v163, %v164
        %vm166 = vcmp.eq.f32.partialorder %v163, inf
        %v167 = vsel %vm166, %v163, %v165
        %vm168 = vcmp.eq.f32.partialorder %v163, 0.0
        %v169 = vand.u32 %v163, 2147483648
        %v170 = vsel %vm168, %v169, %v167
        %v171 = vmax.f32 %v170, 1e-12
        %v172 = vrcp.pop %v171
        %v173 = vmul.f32 %v159, %v172
        %v175 = vlaneseq
        %v176 = vshrl.u32 %v175, 7
        %v177 = vsub.s32 0, %v176
        %v178 = vrot.slane %v160, %v177
        %v180 = vmul.f32 %v173, %v178
        %181 = vst [vmem:[%s158] sm:$0xff] %v180
        %s182 = sand.u32 %s74, 1
        %s183 = scalar_lea.sflag [#allocation4], %s182
        %s184 = sand.u32 %s74, 1
        %s185 = smul.addr %s184, 8
        %s186 = scalar_lea.vmem [#allocation5], %s185
        // Predicated region
        $region33: #{tpu_custom_call.1} parent=27 // pred_check
          %p187 = pneg %p84
        $region34: #{tpu_custom_call.1} parent=27 // pred_check_branch
          %189 = sbr.rel (%p187) target = $region36
        $region35: #{tpu_custom_call.1} parent=27 // pred_region
          %s191 = ssub.s32 128, 128
          %192 = vsyncadd %s183, %s191
          %s193 = smul.addr %s19, 128
          %s194 = scalar_lea.hbm %s2, %s193
          %s196 = sshll.u32 %s186, 4
          %s197 = int_to_ptr.vmem [resolvable:$true] %s196
          %199 = dma.vmem_to_hbm [thread:$0]  %s197, 128, %s194, %s183
        $region36: #{tpu_custom_call.1} parent=27 // pred_fallthru
          _
      $region28: #{tpu_custom_call.1} parent=5 // pred_fallthru
        _
      %p200 = scmp.le.s32.totalorder 2, %s14
      // Predicated region
      $region37: #{tpu_custom_call.1} parent=5 // pred_check
        %p201 = pneg %p200
      $region38: #{tpu_custom_call.1} parent=5 // pred_check_branch
        %203 = sbr.rel (%p201) target = $region40
      $region39: #{tpu_custom_call.1} parent=5 // pred_region
        %s204 = ssub.s32 %s14, 2
        // Predicated region
        $region41: #{tpu_custom_call.1} parent=39 // pred_check
          %p205 = pneg %p90
        $region42: #{tpu_custom_call.1} parent=39 // pred_check_branch
          %207 = sbr.rel (%p205) target = $region44
        $region43: #{tpu_custom_call.1} parent=39 // pred_region
          %s208 = sand.u32 %s75, 1
          %s209 = scalar_lea.sflag [#allocation4], %s208
          %s210 = sand.u32 %s75, 1
          %s211 = smul.addr %s210, 8
          %s212 = scalar_lea.vmem [#allocation5], %s211
          %213 = dma.done %s209, 128
        $region44: #{tpu_custom_call.1} parent=39 // pred_fallthru
          _
      $region40: #{tpu_custom_call.1} parent=5 // pred_fallthru
        _
    $region6: #{tpu_custom_call.1} parent=1 // loop_footer
      %s18 = sadd.s32 1, %s14
    $region7: #{tpu_custom_call.1} parent=1 // loop_footer_branch
      %13 = sbr.rel target = $region3
    $region8: #{tpu_custom_call.1} parent=1 // loop_exit
      _
    %214 = vsyncpa [#allocation3], 1
    %s215 = scalar_lea.sflag [#allocation3], 1
    %216 = vsyncpa %s215, 1
    %217 = vsyncpa [#allocation4], 1
    %s218 = scalar_lea.sflag [#allocation4], 1
    %219 = vsyncpa %s218, 1

</llo_original>
